<compile_context>
chip_gen: v5e
topology: v5e:2x2
jax: 0.10.0
libtpu: 0.0.40
codegen_flags: <defaults>
</compile_context>

<pallas_src>
import jax
import jax.numpy as jnp
from jax.experimental import pallas as pl
from jax.experimental.pallas import tpu as pltpu

_HP = 128            # hidden dim zero-padded to one full lane tile
_TB_DEFAULT = 8192   # target batch rows per grid step (~13 MiB VMEM/step)


def _round_up(n, m):
    return ((n + m - 1) // m) * m


def _cdiv(a, b):
    return (a + b - 1) // b


def _mlp_kernel(x_ref, w1_ref, b1_ref, w2_ref, o_ref):
    """One batch tile of ReLU(x @ W1p + b1p) contracted against the w2 row.

    Block shapes seen by the kernel:
      x_ref : (TB, D)    input rows (f32 or bf16), streamed per grid step
      w1_ref: (D, 128)   zero-padded first-layer weight (VMEM-resident)
      b1_ref: (1, 128)   zero-padded first-layer bias, f32; lane 127 == 1.0
      w2_ref: (8, 128)   row 0 = padded second-layer weight, [0,127] = b2
      o_ref : (1, TB)    predictions with batch on the lane axis
    """
    x = x_ref[...]
    # Layer 1 on the MXU; accumulate in f32 regardless of input dtype.
    h = jnp.dot(x, w1_ref[...], preferred_element_type=jnp.float32)   # (TB,128)
    # Bias + ReLU in f32 on the VPU (full-lane tile, no masked lanes).
    # Lane 127: W1 column is 0, bias 1.0 -> constant 1 that carries b2 below.
    h = jnp.maximum(h + b1_ref[...], 0.0)
    # Layer 2 as w2 @ h^T: (8,128).(TB,128)^T -> (8, TB).  Only row 0 of w2 is
    # non-zero; 8 rows keep the MXU lhs sublane-aligned.  Batch lands on the
    # lane axis, so the store below is lane-dense and unmasked.  Each output
    # lane b depends only on x row b (no cross-row reduction), so unspecified
    # padding rows in the final tile cannot contaminate valid outputs.
    y8 = jnp.einsum('oh,bh->ob', w2_ref[...], h,
                    preferred_element_type=jnp.float32)                # (8, TB)
    o_ref[...] = y8[0:1, :].astype(o_ref.dtype)


def regressor_forward(x, w1, b1, w2, b2, *, block_rows=_TB_DEFAULT):
    """Fused Pallas forward pass of the default Regressor MLP.

    Args:
      x:  (B, D) float32 (or bfloat16) preprocessed features.  No wrapper-side
          dtype cast is performed (a standalone cast costs more HBM traffic
          than it saves).
      w1: (D, H) float32 first-layer weight (pre-transposed vs torch's (H, D)).
      b1: (1, H) or (H,) float32 first-layer bias.
      w2: (H, 1) or (H,) float32 output-layer weight (pre-transposed).
      b2: (1, 1) / (1,) / scalar float32 output-layer bias.
      block_rows: target batch-tile size (rounded to a multiple of 256).

    Returns:
      (B, 1) float32 predictions = ReLU(x @ w1 + b1) @ w2 + b2.
    """
    x = jnp.asarray(x)
    B, D = x.shape
    w1 = jnp.asarray(w1, jnp.float32)
    H = w1.shape[1]
    assert H <= _HP - 1, "hidden width must leave one padded lane free for b2"

    # Keep a bf16 first matmul only if the caller already supplies bf16 x.
    param_dtype = x.dtype if x.dtype == jnp.bfloat16 else jnp.float32

    # Zero-pad parameters to lane-dense shapes (tiny, done once per call; for
    # repeated inference this belongs at parameter-init time).  b2 is folded
    # into lane 127 via a constant-1 hidden unit (W1 column 0, b1 lane = 1.0).
    w1p = jnp.zeros((D, _HP), jnp.float32).at[:, :H].set(w1)
    b1p = jnp.zeros((1, _HP), jnp.float32).at[:, :H].set(
        jnp.asarray(b1, jnp.float32).reshape(1, H))
    b1p = b1p.at[0, _HP - 1].set(1.0)
    w2p = jnp.zeros((8, _HP), jnp.float32).at[0, :H].set(
        jnp.asarray(w2, jnp.float32).reshape(H))
    w2p = w2p.at[0, _HP - 1].set(jnp.asarray(b2, jnp.float32).reshape(()))
    w1p = w1p.astype(param_dtype)

    # Batch tile: multiple of 256 (sublane-aligned x block, lane-aligned (1,TB)
    # output block), at most block_rows, and small enough that there are >= 2
    # tiles whenever B > 512 so both v7x TensorCores get work.  No jnp.pad of
    # x: grid = cdiv(B, tb); the final tile's out-of-range rows are read as
    # unspecified data and their output lanes are dropped on writeback.
    tb = max(256, min(_round_up(block_rows, 256),
                      _round_up(_cdiv(B, 2), 256)))
    n_tiles = _cdiv(B, tb)

    # Per-step VMEM: x block lane-pads D -> 128 and is double-buffered, plus
    # the f32 hidden/(8,TB) temporaries, the output double-buffer and the
    # resident params.  Cap at 64 MiB (v7x per-core physical VMEM).
    vmem_est = (2 * tb * _HP * x.dtype.itemsize   # x double-buffer (lane-padded)
                + 2 * tb * _HP * 4                # h + layer-2 temporaries
                + 2 * tb * 4                      # output double-buffer
                + (D + 1 + 8) * _HP * 4)          # resident params
    vmem_limit = min(64 * 1024 * 1024,
                     max(32 * 1024 * 1024, (vmem_est * 5) // 4))

    flops = 2 * B * D * _HP + 2 * B * 8 * _HP + 2 * B * _HP  # L1 + L2 + bias/ReLU
    bytes_accessed = (B * D * x.dtype.itemsize               # x read
                      + B * 4                                # y write
                      + (D * x.dtype.itemsize + 9 * 4) * _HP)  # resident params

    out = pl.pallas_call(
        _mlp_kernel,
        out_shape=jax.ShapeDtypeStruct((1, B), jnp.float32),
        grid=(n_tiles,),
        in_specs=[
            pl.BlockSpec((tb, D), lambda i: (i, 0)),        # x: streamed
            pl.BlockSpec((D, _HP), lambda i: (0, 0)),       # w1: resident
            pl.BlockSpec((1, _HP), lambda i: (0, 0)),       # b1: resident
            pl.BlockSpec((8, _HP), lambda i: (0, 0)),       # w2 (+ folded b2)
        ],
        out_specs=pl.BlockSpec((1, tb), lambda i: (0, i)),  # batch on lanes
        compiler_params=pltpu.CompilerParams(
            dimension_semantics=("parallel",),
            vmem_limit_bytes=vmem_limit),
        cost_estimate=pl.CostEstimate(
            flops=flops, transcendentals=0, bytes_accessed=bytes_accessed),
    )(x, w1p, b1p, w2p)

    # (1, B) -> (B, 1): row-major element order is identical, so this reshape
    # is a metadata-only bitcast (no extra HBM pass), preserving the torch
    # forward()'s (batch, 1) output shape.
    return out.reshape(B, 1)


def init_params(key, input_size, hidden, output_size=1):
    """Deterministic parameter init mimicking nn.Linear's uniform init."""
    k1, k2, k3, k4 = jax.random.split(key, 4)
    bound1 = 1.0 / (input_size ** 0.5)
    bound2 = 1.0 / (hidden ** 0.5)
    w1 = jax.random.uniform(k1, (input_size, hidden), jnp.float32,
                            minval=-bound1, maxval=bound1)
    b1 = jax.random.uniform(k2, (1, hidden), jnp.float32,
                            minval=-bound1, maxval=bound1)
    w2 = jax.random.uniform(k3, (hidden, output_size), jnp.float32,
                            minval=-bound2, maxval=bound2)
    b2 = jax.random.uniform(k4, (1, output_size), jnp.float32,
                            minval=-bound2, maxval=bound2)
    return w1, b1, w2, b2


if __name__ == "__main__":
    key = jax.random.PRNGKey(0)
    kx, kp = jax.random.split(key)

    input_size = 13     # 8 standardized numerics + 5 one-hot ocean_proximity
    hidden = 10         # neurons_per_layers=[10]

    w1, b1, w2, b2 = init_params(kp, input_size, hidden)

    # Small batch, not a multiple of the 256-row tile: exercises the masked
    # final tile (no jnp.pad of x) across 2 grid steps.
    batch = 300
    x = jax.random.normal(kx, (batch, input_size), dtype=jnp.float32)
    out = jax.block_until_ready(regressor_forward(x, w1, b1, w2, b2))

    # Pure-JAX reference (same math outside the kernel).
    ref = jnp.maximum(x @ w1 + b1, 0.0) @ w2 + b2
    assert out.shape == (batch, 1)
    assert bool(jnp.all(jnp.isfinite(out)))
    assert jnp.allclose(out, ref, atol=1e-4, rtol=1e-4), float(
        jnp.max(jnp.abs(out - ref)))

    # Slightly larger batch: two 1024-row tiles (megacore split) + masked tail.
    batch2 = 2000
    x2 = jax.random.normal(kx, (batch2, input_size), dtype=jnp.float32)
    out2 = jax.block_until_ready(regressor_forward(x2, w1, b1, w2, b2))
    ref2 = jnp.maximum(x2 @ w1 + b1, 0.0) @ w2 + b2
    assert out2.shape == (batch2, 1)
    assert jnp.allclose(out2, ref2, atol=1e-4, rtol=1e-4), float(
        jnp.max(jnp.abs(out2 - ref2)))

    print("KERNEL_OK")
</pallas_src>

<mosaic_0001>
module attributes {stable_mosaic.version = 11 : i64} {
  func.func @_mlp_kernel(%arg0: i32, %arg1: memref<256x13xf32, #tpu.memory_space<vmem>>, %arg2: memref<13x128xf32, #tpu.memory_space<vmem>>, %arg3: memref<1x128xf32, #tpu.memory_space<vmem>>, %arg4: memref<8x128xf32, #tpu.memory_space<vmem>>, %arg5: memref<1x256xf32, #tpu.memory_space<vmem>>) attributes {dimension_semantics = [#tpu.dimension_semantics<parallel>], iteration_bounds = array<i64: 2>, scalar_prefetch = 0 : i64, scratch_operands = 0 : i64, tpu.core_type = #tpu.core_type<tc>, window_params = [{transform_indices = @transform_0, window_bounds = array<i64: 256, 13>}, {pipeline_mode = #tpu.pipeline_mode<synchronous>, transform_indices = @transform_1, window_bounds = array<i64: 13, 128>}, {pipeline_mode = #tpu.pipeline_mode<synchronous>, transform_indices = @transform_2, window_bounds = array<i64: 1, 128>}, {pipeline_mode = #tpu.pipeline_mode<synchronous>, transform_indices = @transform_3, window_bounds = array<i64: 8, 128>}, {transform_indices = @transform_4, window_bounds = array<i64: 1, 256>}]} {
    %c0 = arith.constant 0 : index
    %c0_0 = arith.constant 0 : index
    %0 = vector.load %arg1[%c0, %c0_0] : memref<256x13xf32, #tpu.memory_space<vmem>>, vector<256x13xf32>
    %c0_1 = arith.constant 0 : index
    %c0_2 = arith.constant 0 : index
    %1 = vector.load %arg2[%c0_1, %c0_2] : memref<13x128xf32, #tpu.memory_space<vmem>>, vector<13x128xf32>
    %cst = arith.constant dense<0.000000e+00> : vector<256x128xf32>
    %2 = tpu.matmul %0, %1, %cst {dimension_numbers = #tpu.dot_dimension_numbers<[1], [0], [0], [1], [0, 0, 1, 1], [], []>} : vector<256x13xf32>, vector<13x128xf32>, vector<256x128xf32> -> vector<256x128xf32>
    %c0_3 = arith.constant 0 : index
    %c0_4 = arith.constant 0 : index
    %3 = vector.load %arg3[%c0_3, %c0_4] : memref<1x128xf32, #tpu.memory_space<vmem>>, vector<1x128xf32>
    %4 = vector.broadcast %3 : vector<1x128xf32> to vector<256x128xf32>
    %5 = arith.addf %2, %4 : vector<256x128xf32>
    %cst_5 = arith.constant 0.000000e+00 : f32
    %6 = vector.broadcast %cst_5 : f32 to vector<256x128xf32>
    %7 = arith.maximumf %5, %6 : vector<256x128xf32>
    %c0_6 = arith.constant 0 : index
    %c0_7 = arith.constant 0 : index
    %8 = vector.load %arg4[%c0_6, %c0_7] : memref<8x128xf32, #tpu.memory_space<vmem>>, vector<8x128xf32>
    "tpu.trace_start"() <{level = 10 : i32, message = "oh,bh->ob"}> : () -> ()
    %cst_8 = arith.constant dense<0.000000e+00> : vector<8x256xf32>
    %9 = tpu.matmul %8, %7, %cst_8 {dimension_numbers = #tpu.dot_dimension_numbers<[1], [1], [0], [0], [0, 0, 1, 0], [], []>} : vector<8x128xf32>, vector<256x128xf32>, vector<8x256xf32> -> vector<8x256xf32>
    "tpu.trace_stop"() : () -> ()
    %10 = vector.extract_strided_slice %9 {offsets = [0, 0], sizes = [1, 256], strides = [1, 1]} : vector<8x256xf32> to vector<1x256xf32>
    %c0_9 = arith.constant 0 : index
    %c0_10 = arith.constant 0 : index
    %11 = vector.load %arg5[%c0_9, %c0_10] : memref<1x256xf32, #tpu.memory_space<vmem>>, vector<1x256xf32>
    tpu.vector_store %arg5[%c0_9, %c0_10], %10 {strides = array<i32>} : memref<1x256xf32, #tpu.memory_space<vmem>>, vector<1x256xf32>,
    return
  }
  func.func @transform_0(%arg0: i32) -> (i32, i32) {
    %c0_i32 = arith.constant 0 : i32
    %c0_i32_0 = arith.constant 0 : i32
    return %arg0, %c0_i32 : i32, i32
  }
  func.func @transform_1(%arg0: i32) -> (i32, i32) {
    %c0_i32 = arith.constant 0 : i32
    %c0_i32_0 = arith.constant 0 : i32
    %c0_i32_1 = arith.constant 0 : i32
    return %c0_i32, %c0_i32_0 : i32, i32
  }
  func.func @transform_2(%arg0: i32) -> (i32, i32) {
    %c0_i32 = arith.constant 0 : i32
    %c0_i32_0 = arith.constant 0 : i32
    %c0_i32_1 = arith.constant 0 : i32
    return %c0_i32, %c0_i32_0 : i32, i32
  }
  func.func @transform_3(%arg0: i32) -> (i32, i32) {
    %c0_i32 = arith.constant 0 : i32
    %c0_i32_0 = arith.constant 0 : i32
    %c0_i32_1 = arith.constant 0 : i32
    return %c0_i32, %c0_i32_0 : i32, i32
  }
  func.func @transform_4(%arg0: i32) -> (i32, i32) {
    %c0_i32 = arith.constant 0 : i32
    %c0_i32_0 = arith.constant 0 : i32
    return %c0_i32, %arg0 : i32, i32
  }
}

</mosaic_0001>

<llo_original>
// kernel: tpu_custom_call.1
$region0: #{tpu_custom_call.1}
  #allocation0 [shape = 'u32[]', space=smem, size = 0x4, offset = 0x4, fixed_abs, tag = 'smem constant byte address 0x4 - core index']
  #allocation1 [shape = 'u32[72,128]{1,0:T(1,128)}', space=vmem, size = 0x9000, scoped, tag = 'internal scratch']
  %s0 = inlined_call_operand.vmem [shape: f32[300,13], index: 0, kind: input, shape index: {}]
  %s1 = inlined_call_operand.vmem [shape: f32[13,128], index: 1, kind: input, shape index: {}]
  %s2 = inlined_call_operand.vmem [shape: f32[1,128], index: 2, kind: input, shape index: {}]
  %s3 = inlined_call_operand.vmem [shape: f32[8,128], index: 3, kind: input, shape index: {}]
  %s4 = inlined_call_operand.hbm [shape: f32[1,300], index: 4, kind: output, shape index: {}]
  %s5 = sld [smem:[#allocation0]]
  $region49: #{tpu_custom_call.1} parent=0
    _
  %s7 = ssub.s32 1, %s5
  %s8 = scalar_select 0, %s7, %s5
  $region1: #{tpu_custom_call.1} parent=0
    #allocation2 [shape = 'u8[2048]{0}', space=vmem, size = 0x800, scoped, tag = 'output window, operand 0']
    #allocation3 [shape = 's32[2]{0}', space=sflag, size = 0x8, scoped, tag = 'scoped memory for tpu_custom_call.1']
    %9 = vsyncpa [#allocation3], 0
    %s10 = scalar_lea.sflag [#allocation3], 1
    %11 = vsyncpa %s10, 0
    loop: start=0, step=1, limit=4
    $region2: #{tpu_custom_call.1} parent=1 // loop_pre_header
      _
    $region3: #{tpu_custom_call.1} parent=1 // loop_header
      %s13 = sphi 0, %s17
      %p14 = scmp.ge.s32.totalorder %s13, 4
      %s23 = sphi 0, %s25
      %s26 = sphi 0, %s23
      %s27 = sphi 0, %s26
      %s43 = sphi 0, %s27
      %s47 = sphi 0, %s47
      %s49 = sphi 0, %s47
      %s50 = sphi 0, %s49
      %s64 = sphi 0, %s50
      %s68 = sphi 0, %s68
      %s70 = sphi 0, %s68
      %s71 = sphi 0, %s70
      %s85 = sphi 0, %s71
      %s89 = sphi 0, %s89
      %s91 = sphi 0, %s89
      %s92 = sphi 0, %s91
      %s106 = sphi 0, %s92
      %s112 = sphi 0, %s114
      %s115 = sphi 0, %s112
      %s116 = sphi 0, %s115
      %s132 = sphi 0, %s116
    $region4: #{tpu_custom_call.1} parent=1 // loop_header_branch
      %16 = sbr.rel (%p14) target = $region8
    $region5: #{tpu_custom_call.1} parent=1 // loop_body
      %s18 = ssub.s32 %s13, 1
      %s19 = ssub.s32 %s13, 2
      %s20 = sadd.s32 %s13, 1
      %s21 = ssub.s32 %s13, %s20
      %p22 = scmp.eq.s32.totalorder %s21, 0
      %s24 = sadd.s32 %s23, 1
      %s25 = scalar_select %p22, %s23, %s24
      %p28 = pneg %p22
      %p29 = scmp.eq.s32.totalorder %s13, 1
      %p30 = por %p28, %p29
      %p31 = scmp.ne.s32.totalorder %s23, %s26
      %p32 = scmp.eq.s32.totalorder %s13, 0
      %p33 = por %p31, %p32
      %p34 = scmp.ne.s32.totalorder %s23, %s26
      %p35 = scmp.eq.s32.totalorder %s18, 1
      %p36 = por %p34, %p35
      %p37 = scmp.ne.s32.totalorder %s26, %s27
      %p38 = scmp.eq.s32.totalorder %s18, 0
      %p39 = por %p37, %p38
      %p40 = scmp.ne.s32.totalorder %s26, %s27
      %p41 = scmp.eq.s32.totalorder %s19, 1
      %p42 = por %p40, %p41
      %p44 = scmp.ne.s32.totalorder %s27, %s43
      %p45 = scmp.eq.s32.totalorder %s19, 0
      %p46 = por %p44, %p45
      %s48 = sadd.s32 %s47, 1
      %p51 = scmp.eq.s32.totalorder %s13, 1
      %p52 = scmp.ne.s32.totalorder %s47, %s49
      %p53 = scmp.eq.s32.totalorder %s13, 0
      %p54 = por %p52, %p53
      %p55 = scmp.ne.s32.totalorder %s47, %s49
      %p56 = scmp.eq.s32.totalorder %s18, 1
      %p57 = por %p55, %p56
      %p58 = scmp.ne.s32.totalorder %s49, %s50
      %p59 = scmp.eq.s32.totalorder %s18, 0
      %p60 = por %p58, %p59
      %p61 = scmp.ne.s32.totalorder %s49, %s50
      %p62 = scmp.eq.s32.totalorder %s19, 1
      %p63 = por %p61, %p62
      %p65 = scmp.ne.s32.totalorder %s50, %s64
      %p66 = scmp.eq.s32.totalorder %s19, 0
      %p67 = por %p65, %p66
      %s69 = sadd.s32 %s68, 1
      %p72 = scmp.eq.s32.totalorder %s13, 1
      %p73 = scmp.ne.s32.totalorder %s68, %s70
      %p74 = scmp.eq.s32.totalorder %s13, 0
      %p75 = por %p73, %p74
      %p76 = scmp.ne.s32.totalorder %s68, %s70
      %p77 = scmp.eq.s32.totalorder %s18, 1
      %p78 = por %p76, %p77
      %p79 = scmp.ne.s32.totalorder %s70, %s71
      %p80 = scmp.eq.s32.totalorder %s18, 0
      %p81 = por %p79, %p80
      %p82 = scmp.ne.s32.totalorder %s70, %s71
      %p83 = scmp.eq.s32.totalorder %s19, 1
      %p84 = por %p82, %p83
      %p86 = scmp.ne.s32.totalorder %s71, %s85
      %p87 = scmp.eq.s32.totalorder %s19, 0
      %p88 = por %p86, %p87
      %s90 = sadd.s32 %s89, 1
      %p93 = scmp.eq.s32.totalorder %s13, 1
      %p94 = scmp.ne.s32.totalorder %s89, %s91
      %p95 = scmp.eq.s32.totalorder %s13, 0
      %p96 = por %p94, %p95
      %p97 = scmp.ne.s32.totalorder %s89, %s91
      %p98 = scmp.eq.s32.totalorder %s18, 1
      %p99 = por %p97, %p98
      %p100 = scmp.ne.s32.totalorder %s91, %s92
      %p101 = scmp.eq.s32.totalorder %s18, 0
      %p102 = por %p100, %p101
      %p103 = scmp.ne.s32.totalorder %s91, %s92
      %p104 = scmp.eq.s32.totalorder %s19, 1
      %p105 = por %p103, %p104
      %p107 = scmp.ne.s32.totalorder %s92, %s106
      %p108 = scmp.eq.s32.totalorder %s19, 0
      %p109 = por %p107, %p108
      %s110 = ssub.s32 %s13, %s20
      %p111 = scmp.eq.s32.totalorder %s110, 0
      %s113 = sadd.s32 %s112, 1
      %s114 = scalar_select %p111, %s112, %s113
      %p117 = pneg %p111
      %p118 = scmp.eq.s32.totalorder %s13, 1
      %p119 = por %p117, %p118
      %p120 = scmp.ne.s32.totalorder %s112, %s115
      %p121 = scmp.eq.s32.totalorder %s13, 0
      %p122 = por %p120, %p121
      %p123 = scmp.ne.s32.totalorder %s112, %s115
      %p124 = scmp.eq.s32.totalorder %s18, 1
      %p125 = por %p123, %p124
      %p126 = scmp.ne.s32.totalorder %s115, %s116
      %p127 = scmp.eq.s32.totalorder %s18, 0
      %p128 = por %p126, %p127
      %p129 = scmp.ne.s32.totalorder %s115, %s116
      %p130 = scmp.eq.s32.totalorder %s19, 1
      %p131 = por %p129, %p130
      %p133 = scmp.ne.s32.totalorder %s116, %s132
      %p134 = scmp.eq.s32.totalorder %s19, 0
      %p135 = por %p133, %p134
      %p136 = scmp.le.s32.totalorder 1, %s13
      %p137 = scmp.lt.s32.totalorder %s13, 3
      %p138 = pnand %p136, %p137
      %p139 = pneg %p138
      // Predicated region
      $region9: #{tpu_custom_call.1} parent=5 // pred_check
        _
      $region10: #{tpu_custom_call.1} parent=5 // pred_check_branch
        %141 = sbr.rel (%p138) target = $region12
      $region11: #{tpu_custom_call.1} parent=5 // pred_region
        %s142 = ssub.s32 %s13, 1
        // Predicated region
        $region13: #{tpu_custom_call.1} parent=11 // pred_check
          %p143 = pneg %p60
        $region14: #{tpu_custom_call.1} parent=11 // pred_check_branch
          %145 = sbr.rel (%p143) target = $region16
        $region15: #{tpu_custom_call.1} parent=11 // pred_region
          _
        $region16: #{tpu_custom_call.1} parent=11 // pred_fallthru
          _
        // Predicated region
        $region17: #{tpu_custom_call.1} parent=11 // pred_check
          %p146 = pneg %p81
        $region18: #{tpu_custom_call.1} parent=11 // pred_check_branch
          %148 = sbr.rel (%p146) target = $region20
        $region19: #{tpu_custom_call.1} parent=11 // pred_region
          _
        $region20: #{tpu_custom_call.1} parent=11 // pred_fallthru
          _
        // Predicated region
        $region21: #{tpu_custom_call.1} parent=11 // pred_check
          %p149 = pneg %p102
        $region22: #{tpu_custom_call.1} parent=11 // pred_check_branch
          %151 = sbr.rel (%p149) target = $region24
        $region23: #{tpu_custom_call.1} parent=11 // pred_region
          _
        $region24: #{tpu_custom_call.1} parent=11 // pred_fallthru
          _
      $region12: #{tpu_custom_call.1} parent=5 // pred_fallthru
        _
      %p152 = scmp.lt.s32.totalorder %s13, 2
      // Predicated region
      $region25: #{tpu_custom_call.1} parent=5 // pred_check
        %p153 = pneg %p152
      $region26: #{tpu_custom_call.1} parent=5 // pred_check_branch
        %155 = sbr.rel (%p153) target = $region28
      $region27: #{tpu_custom_call.1} parent=5 // pred_region
        // Predicated region
        $region29: #{tpu_custom_call.1} parent=27 // pred_check
          %p156 = pneg %p33
        $region30: #{tpu_custom_call.1} parent=27 // pred_check_branch
          %158 = sbr.rel (%p156) target = $region32
        $region31: #{tpu_custom_call.1} parent=27 // pred_region
          %s159 = smul.u32 32, %s13
          %s160 = ssub.s32 38, %s159
          %p161 = scmp.lt.s32.totalorder %s160, 32
          %s162 = scalar_select %p161, %s160, 32
          %s163 = smul.u32 8, %s162
          %p164 = scmp.lt.s32.totalorder %s159, 37
          %s165 = scalar_select %p164, %s159, 37
          %s166 = smul.addr %s165, 8
          %s167 = scalar_lea.vmem %s0, %s166
          %s168 = smul.u32 32, %s13
          %s169 = ssub.s32 38, %s168
          %p170 = scmp.lt.s32.totalorder %s169, 32
          %s171 = scalar_select %p170, %s169, 32
          %s172 = smul.u32 8, %s171
        $region32: #{tpu_custom_call.1} parent=27 // pred_fallthru
          _
      $region28: #{tpu_custom_call.1} parent=5 // pred_fallthru
        _
      %p173 = scmp.le.s32.totalorder 1, %s13
      %p174 = scmp.lt.s32.totalorder %s13, 3
      %p175 = pnand %p173, %p174
      %p176 = pneg %p175
      // Predicated region
      $region33: #{tpu_custom_call.1} parent=5 // pred_check
        _
      $region34: #{tpu_custom_call.1} parent=5 // pred_check_branch
        %178 = sbr.rel (%p175) target = $region36
      $region35: #{tpu_custom_call.1} parent=5 // pred_region
        %s179 = ssub.s32 %s13, 1
        %s180 = smul.u32 32, %s18
        %s181 = ssub.s32 38, %s180
        %p182 = scmp.lt.s32.totalorder %s181, 32
        %s183 = scalar_select %p182, %s181, 32
        %s184 = smul.u32 8, %s183
        %p185 = scmp.lt.s32.totalorder %s180, 37
        %s186 = scalar_select %p185, %s180, 37
        %s187 = smul.addr %s186, 8
        %s188 = scalar_lea.vmem %s0, %s187
        %p189 = pneg %p39
        %p190 = pneg %p36
        %p191 = pneg %p60
        %p192 = pneg %p57
        %p193 = pneg %p81
        %p194 = pneg %p78
        %p195 = pneg %p102
        %p196 = pneg %p99
        %p197 = pneg %p128
        %p198 = pneg %p125
        %s199 = sand.u32 %s115, 1
        %s200 = scalar_lea.sflag [#allocation3], %s199
        %s201 = sand.u32 %s115, 1
        %s202 = smul.addr %s201, 2
        %s203 = scalar_lea.vmem [#allocation2], %s202
        %s204 = smul.u32 32, %s18
        %s205 = ssub.s32 38, %s204
        %p206 = scmp.lt.s32.totalorder %s205, 32
        %s207 = scalar_select %p206, %s205, 32
        %s208 = smul.u32 8, %s207
        %p209 = scmp.lt.s32.totalorder %s204, 37
        %s210 = scalar_select %p209, %s204, 37
        %s211 = smul.addr %s210, 8
        %s212 = scalar_lea.vmem %s0, %s211
        %s213 = smul.u32 32, %s18
        %s214 = ssub.s32 38, %s213
        %p215 = scmp.lt.s32.totalorder %s214, 32
        %s216 = scalar_select %p215, %s214, 32
        %s217 = smul.u32 8, %s216
        %s218 = smul.u32 2, %s18
        %s219 = ssub.s32 3, %s218
        %p220 = scmp.lt.s32.totalorder %s219, 2
        %s221 = scalar_select %p220, %s219, 2
        %v222 = vld [vmem:[%s212] sm:$0xff]
        %v223 = vld [vmem:[%s212 + $0x8] sm:$0xff]
        %v224 = vld [vmem:[%s212 + $0x10] sm:$0xff]
        %v225 = vld [vmem:[%s212 + $0x18] sm:$0xff]
        %v226 = vld [vmem:[%s212 + $0x20] sm:$0xff]
        %v227 = vld [vmem:[%s212 + $0x28] sm:$0xff]
        %v228 = vld [vmem:[%s212 + $0x30] sm:$0xff]
        %v229 = vld [vmem:[%s212 + $0x38] sm:$0xff]
        %v230 = vld [vmem:[%s212 + $0x40] sm:$0xff]
        %v231 = vld [vmem:[%s212 + $0x48] sm:$0xff]
        %v232 = vld [vmem:[%s212 + $0x50] sm:$0xff]
        %v233 = vld [vmem:[%s212 + $0x58] sm:$0xff]
        %v234 = vld [vmem:[%s212 + $0x60] sm:$0xff]
        %v235 = vld [vmem:[%s212 + $0x68] sm:$0xff]
        %v236 = vld [vmem:[%s212 + $0x70] sm:$0xff]
        %v237 = vld [vmem:[%s212 + $0x78] sm:$0xff]
        %v238 = vld [vmem:[%s212 + $0x80] sm:$0xff]
        %v239 = vld [vmem:[%s212 + $0x88] sm:$0xff]
        %v240 = vld [vmem:[%s212 + $0x90] sm:$0xff]
        %v241 = vld [vmem:[%s212 + $0x98] sm:$0xff]
        %v242 = vld [vmem:[%s212 + $0xa0] sm:$0xff]
        %v243 = vld [vmem:[%s212 + $0xa8] sm:$0xff]
        %v244 = vld [vmem:[%s212 + $0xb0] sm:$0xff]
        %v245 = vld [vmem:[%s212 + $0xb8] sm:$0xff]
        %v246 = vld [vmem:[%s212 + $0xc0] sm:$0xff]
        %v247 = vld [vmem:[%s212 + $0xc8] sm:$0xff]
        %v248 = vld [vmem:[%s212 + $0xd0] sm:$0xff]
        %v249 = vld [vmem:[%s212 + $0xd8] sm:$0xff]
        %v250 = vld [vmem:[%s212 + $0xe0] sm:$0xff]
        %v251 = vld [vmem:[%s212 + $0xe8] sm:$0xff]
        %v252 = vld [vmem:[%s212 + $0xf0] sm:$0xff]
        %v253 = vld [vmem:[%s212 + $0xf8] sm:$0xff]
        %v254 = vld [vmem:[%s1] sm:$0xff]
        %v255 = vld [vmem:[%s1 + $0x8] sm:$0x1f]
        %v256 = vld [vmem:[%s2] sm:$0x1]
        %v258 = vperm.slane %v256, 0
        %vm260 = vcmask 105472
        %v262 = vsel %vm260, %v222, 0
        %v265 = vsel %vm260, %v223, 0
        %v268 = vsel %vm260, %v224, 0
        %v271 = vsel %vm260, %v225, 0
        %v274 = vsel %vm260, %v226, 0
        %v277 = vsel %vm260, %v227, 0
        %v280 = vsel %vm260, %v228, 0
        %v283 = vsel %vm260, %v229, 0
        %v286 = vsel %vm260, %v230, 0
        %v289 = vsel %vm260, %v231, 0
        %v292 = vsel %vm260, %v232, 0
        %v295 = vsel %vm260, %v233, 0
        %v298 = vsel %vm260, %v234, 0
        %v301 = vsel %vm260, %v235, 0
        %v304 = vsel %vm260, %v236, 0
        %v307 = vsel %vm260, %v237, 0
        %v310 = vsel %vm260, %v238, 0
        %v313 = vsel %vm260, %v239, 0
        %v316 = vsel %vm260, %v240, 0
        %v319 = vsel %vm260, %v241, 0
        %v322 = vsel %vm260, %v242, 0
        %v325 = vsel %vm260, %v243, 0
        %v328 = vsel %vm260, %v244, 0
        %v331 = vsel %vm260, %v245, 0
        %v334 = vsel %vm260, %v246, 0
        %v337 = vsel %vm260, %v247, 0
        %v340 = vsel %vm260, %v248, 0
        %v343 = vsel %vm260, %v249, 0
        %v346 = vsel %vm260, %v250, 0
        %v349 = vsel %vm260, %v251, 0
        %v352 = vsel %vm260, %v252, 0
        %v355 = vsel %vm260, %v253, 0
        %vm357 = vcmask 1044480
        %v359 = vsel %vm357, %v255, 0
        %361 = vmatpush.msra.mxu0 0.0
        %362 = vmatpush.msra.mxu0 0.0
        %363 = vmatpush.msra.mxu0 0.0
        %364 = vmatpush.msra.mxu0 0.0
        %365 = vmatpush.msra.mxu0 0.0
        %366 = vmatpush.msra.mxu0 0.0
        %367 = vmatpush.msra.mxu0 0.0
        %368 = vmatpush.msra.mxu0 0.0
        %369 = vmatpush.msra.mxu0 0.0
        %370 = vmatpush.msra.mxu0 0.0
        %371 = vmatpush.msra.mxu0 0.0
        %372 = vmatpush.msra.mxu0 0.0
        %373 = vmatpush.msra.mxu0 0.0
        %374 = vmatpush.msra.mxu0 0.0
        %375 = vmatpush.msra.mxu0 %v359
        %376 = vmatpush.msra.mxu0 %v254
        %377 = vmatmul.f32.gmra.mxu0 %v262
        %v378 = vpop.f32.mrf.mxu0
        %v379 = vadd.f32 %v258, %v378
        %380 = vmatmul.f32.gmra.mxu0 %v265
        %v381 = vpop.f32.mrf.mxu0
        %v382 = vadd.f32 %v258, %v381
        %383 = vmatmul.f32.gmra.mxu0 %v268
        %v384 = vpop.f32.mrf.mxu0
        %v385 = vadd.f32 %v258, %v384
        %386 = vmatmul.f32.gmra.mxu0 %v271
        %v387 = vpop.f32.mrf.mxu0
        %v388 = vadd.f32 %v258, %v387
        %389 = vmatmul.f32.gmra.mxu0 %v274
        %v390 = vpop.f32.mrf.mxu0
        %v391 = vadd.f32 %v258, %v390
        %392 = vmatmul.f32.gmra.mxu0 %v277
        %v393 = vpop.f32.mrf.mxu0
        %v394 = vadd.f32 %v258, %v393
        %395 = vmatmul.f32.gmra.mxu0 %v280
        %v396 = vpop.f32.mrf.mxu0
        %v397 = vadd.f32 %v258, %v396
        %398 = vmatmul.f32.gmra.mxu0 %v283
        %v399 = vpop.f32.mrf.mxu0
        %v400 = vadd.f32 %v258, %v399
        %401 = vmatmul.f32.gmra.mxu0 %v286
        %v402 = vpop.f32.mrf.mxu0
        %v403 = vadd.f32 %v258, %v402
        %404 = vmatmul.f32.gmra.mxu0 %v289
        %v405 = vpop.f32.mrf.mxu0
        %v406 = vadd.f32 %v258, %v405
        %407 = vmatmul.f32.gmra.mxu0 %v292
        %v408 = vpop.f32.mrf.mxu0
        %v409 = vadd.f32 %v258, %v408
        %410 = vmatmul.f32.gmra.mxu0 %v295
        %v411 = vpop.f32.mrf.mxu0
        %v412 = vadd.f32 %v258, %v411
        %413 = vmatmul.f32.gmra.mxu0 %v298
        %v414 = vpop.f32.mrf.mxu0
        %v415 = vadd.f32 %v258, %v414
        %416 = vmatmul.f32.gmra.mxu0 %v301
        %v417 = vpop.f32.mrf.mxu0
        %v418 = vadd.f32 %v258, %v417
        %419 = vmatmul.f32.gmra.mxu0 %v304
        %v420 = vpop.f32.mrf.mxu0
        %v421 = vadd.f32 %v258, %v420
        %422 = vmatmul.f32.gmra.mxu0 %v307
        %v423 = vpop.f32.mrf.mxu0
        %v424 = vadd.f32 %v258, %v423
        %425 = vmatmul.f32.gmra.mxu0 %v310
        %v426 = vpop.f32.mrf.mxu0
        %v427 = vadd.f32 %v258, %v426
        %428 = vmatmul.f32.gmra.mxu0 %v313
        %v429 = vpop.f32.mrf.mxu0
        %v430 = vadd.f32 %v258, %v429
        %431 = vmatmul.f32.gmra.mxu0 %v316
        %v432 = vpop.f32.mrf.mxu0
        %v433 = vadd.f32 %v258, %v432
        %434 = vmatmul.f32.gmra.mxu0 %v319
        %v435 = vpop.f32.mrf.mxu0
        %v436 = vadd.f32 %v258, %v435
        %437 = vmatmul.f32.gmra.mxu0 %v322
        %v438 = vpop.f32.mrf.mxu0
        %v439 = vadd.f32 %v258, %v438
        %440 = vmatmul.f32.gmra.mxu0 %v325
        %v441 = vpop.f32.mrf.mxu0
        %v442 = vadd.f32 %v258, %v441
        %443 = vmatmul.f32.gmra.mxu0 %v328
        %v444 = vpop.f32.mrf.mxu0
        %v445 = vadd.f32 %v258, %v444
        %446 = vmatmul.f32.gmra.mxu0 %v331
        %v447 = vpop.f32.mrf.mxu0
        %v448 = vadd.f32 %v258, %v447
        %449 = vmatmul.f32.gmra.mxu0 %v334
        %v450 = vpop.f32.mrf.mxu0
        %v451 = vadd.f32 %v258, %v450
        %452 = vmatmul.f32.gmra.mxu0 %v337
        %v453 = vpop.f32.mrf.mxu0
        %v454 = vadd.f32 %v258, %v453
        %455 = vmatmul.f32.gmra.mxu0 %v340
        %v456 = vpop.f32.mrf.mxu0
        %v457 = vadd.f32 %v258, %v456
        %458 = vmatmul.f32.gmra.mxu0 %v343
        %v459 = vpop.f32.mrf.mxu0
        %v460 = vadd.f32 %v258, %v459
        %461 = vmatmul.f32.gmra.mxu0 %v346
        %v462 = vpop.f32.mrf.mxu0
        %v463 = vadd.f32 %v258, %v462
        %464 = vmatmul.f32.gmra.mxu0 %v349
        %v465 = vpop.f32.mrf.mxu0
        %v466 = vadd.f32 %v258, %v465
        %467 = vmatmul.f32.gmra.mxu0 %v352
        %v468 = vpop.f32.mrf.mxu0
        %v469 = vadd.f32 %v258, %v468
        %470 = vmatmul.f32.gmra.mxu0 %v355
        %v471 = vpop.f32.mrf.mxu0
        %v472 = vadd.f32 %v258, %v471
        %473 = vdwg.mxu0
        %v474 = vmax.f32 %v379, 0.0
        %v475 = vmax.f32 %v382, 0.0
        %v476 = vmax.f32 %v385, 0.0
        %v477 = vmax.f32 %v388, 0.0
        %v478 = vmax.f32 %v391, 0.0
        %v479 = vmax.f32 %v394, 0.0
        %v480 = vmax.f32 %v397, 0.0
        %v481 = vmax.f32 %v400, 0.0
        %v482 = vmax.f32 %v403, 0.0
        %v483 = vmax.f32 %v406, 0.0
        %v484 = vmax.f32 %v409, 0.0
        %v485 = vmax.f32 %v412, 0.0
        %v486 = vmax.f32 %v415, 0.0
        %v487 = vmax.f32 %v418, 0.0
        %v488 = vmax.f32 %v421, 0.0
        %v489 = vmax.f32 %v424, 0.0
        %v490 = vmax.f32 %v427, 0.0
        %v491 = vmax.f32 %v430, 0.0
        %v492 = vmax.f32 %v433, 0.0
        %v493 = vmax.f32 %v436, 0.0
        %v494 = vmax.f32 %v439, 0.0
        %v495 = vmax.f32 %v442, 0.0
        %v496 = vmax.f32 %v445, 0.0
        %v497 = vmax.f32 %v448, 0.0
        %v498 = vmax.f32 %v451, 0.0
        %v499 = vmax.f32 %v454, 0.0
        %v500 = vmax.f32 %v457, 0.0
        %v501 = vmax.f32 %v460, 0.0
        %v502 = vmax.f32 %v463, 0.0
        %v503 = vmax.f32 %v466, 0.0
        %v504 = vmax.f32 %v469, 0.0
        %v505 = vmax.f32 %v472, 0.0
        %v506 = vld [vmem:[%s3] sm:$0xff]
        %507 = vmatpush.xpose.msra.mxu0 %v489
        %508 = vmatpush.xpose.msra.mxu0 %v488
        %509 = vmatpush.xpose.msra.mxu0 %v487
        %510 = vmatpush.xpose.msra.mxu0 %v486
        %511 = vmatpush.xpose.msra.mxu0 %v485
        %512 = vmatpush.xpose.msra.mxu0 %v484
        %513 = vmatpush.xpose.msra.mxu0 %v483
        %514 = vmatpush.xpose.msra.mxu0 %v482
        %515 = vmatpush.xpose.msra.mxu0 %v481
        %516 = vmatpush.xpose.msra.mxu0 %v480
        %517 = vmatpush.xpose.msra.mxu0 %v479
        %518 = vmatpush.xpose.msra.mxu0 %v478
        %519 = vmatpush.xpose.msra.mxu0 %v477
        %520 = vmatpush.xpose.msra.mxu0 %v476
        %521 = vmatpush.xpose.msra.mxu0 %v475
        %522 = vmatpush.xpose.msra.mxu0 %v474
        %523 = vmatmul.f32.gmra.mxu0 %v506
        %v524 = vpop.f32.mrf.mxu0
        %v525 = vadd.f32 0.0, %v524
        %526 = vdwg.mxu0
        %527 = vmatpush.xpose.msra.mxu0 %v505
        %528 = vmatpush.xpose.msra.mxu0 %v504
        %529 = vmatpush.xpose.msra.mxu0 %v503
        %530 = vmatpush.xpose.msra.mxu0 %v502
        %531 = vmatpush.xpose.msra.mxu0 %v501
        %532 = vmatpush.xpose.msra.mxu0 %v500
        %533 = vmatpush.xpose.msra.mxu0 %v499
        %534 = vmatpush.xpose.msra.mxu0 %v498
        %535 = vmatpush.xpose.msra.mxu0 %v497
        %536 = vmatpush.xpose.msra.mxu0 %v496
        %537 = vmatpush.xpose.msra.mxu0 %v495
        %538 = vmatpush.xpose.msra.mxu0 %v494
        %539 = vmatpush.xpose.msra.mxu0 %v493
        %540 = vmatpush.xpose.msra.mxu0 %v492
        %541 = vmatpush.xpose.msra.mxu0 %v491
        %542 = vmatpush.xpose.msra.mxu0 %v490
        %543 = vmatmul.f32.gmra.mxu0 %v506
        %v544 = vpop.f32.mrf.mxu0
        %v545 = vadd.f32 0.0, %v544
        %546 = vdwg.mxu0
        %v549 = vrot.slane %v545, 7
        %vm550 = vcmask 1040384
        %v551 = vsel %vm550, %v525, %v549
        %v553 = vlaneseq
        %vm554 = vcmp.ge.s32.totalorder %v553, 0
        %vm555 = vcmp.lt.s32.totalorder %v553, 256
        %vm556 = vmand %vm554, %vm555
        %557 = vst.msk [vmem:[%s203] sm:$0x3] %vm556, %v551
        %s558 = sand.u32 %s115, 1
        %s559 = scalar_lea.sflag [#allocation3], %s558
        %s560 = sand.u32 %s115, 1
        %s561 = smul.addr %s560, 2
        %s562 = scalar_lea.vmem [#allocation2], %s561
        // Predicated region
        $region37: #{tpu_custom_call.1} parent=35 // pred_check
          %p563 = pneg %p125
        $region38: #{tpu_custom_call.1} parent=35 // pred_check_branch
          %565 = sbr.rel (%p563) target = $region40
        $region39: #{tpu_custom_call.1} parent=35 // pred_region
          %s566 = smul.u32 2, %s18
          %s567 = ssub.s32 3, %s566
          %p568 = scmp.lt.s32.totalorder %s567, 2
          %s569 = scalar_select %p568, %s567, 2
          %s570 = ssub.s32 2, %s569
          %s571 = sshll.u32 %s570, 4
          %572 = vsyncadd %s559, %s571
          %p573 = scmp.ne.s32.totalorder 0, %s569
          %s574 = scalar_lea.hbm %s4, %s566
          %s575 = sshll.u32 %s569, 4
          %s576 = sshll.u32 %s562, 4
          %s577 = int_to_ptr.vmem [resolvable:$true] %s576
          %s578 = sshll.u32 %s574, 4
          %s579 = int_to_ptr.hbm [resolvable:$true] %s578
          %581 = dma.vmem_to_hbm [thread:$0]  (%p573), %s577, %s575, %s579, %s559
        $region40: #{tpu_custom_call.1} parent=35 // pred_fallthru
          _
      $region36: #{tpu_custom_call.1} parent=5 // pred_fallthru
        _
      %p582 = scmp.le.s32.totalorder 2, %s13
      // Predicated region
      $region41: #{tpu_custom_call.1} parent=5 // pred_check
        %p583 = pneg %p582
      $region42: #{tpu_custom_call.1} parent=5 // pred_check_branch
        %585 = sbr.rel (%p583) target = $region44
      $region43: #{tpu_custom_call.1} parent=5 // pred_region
        %s586 = ssub.s32 %s13, 2
        // Predicated region
        $region45: #{tpu_custom_call.1} parent=43 // pred_check
          %p587 = pneg %p131
        $region46: #{tpu_custom_call.1} parent=43 // pred_check_branch
          %589 = sbr.rel (%p587) target = $region48
        $region47: #{tpu_custom_call.1} parent=43 // pred_region
          %s590 = sand.u32 %s116, 1
          %s591 = scalar_lea.sflag [#allocation3], %s590
          %s592 = sand.u32 %s116, 1
          %s593 = smul.addr %s592, 2
          %s594 = scalar_lea.vmem [#allocation2], %s593
          %596 = dma.done %s591, 32
        $region48: #{tpu_custom_call.1} parent=43 // pred_fallthru
          _
      $region44: #{tpu_custom_call.1} parent=5 // pred_fallthru
        _
    $region6: #{tpu_custom_call.1} parent=1 // loop_footer
      %s17 = sadd.s32 1, %s13
    $region7: #{tpu_custom_call.1} parent=1 // loop_footer_branch
      %12 = sbr.rel target = $region3
    $region8: #{tpu_custom_call.1} parent=1 // loop_exit
      _
    %597 = vsyncpa [#allocation3], 1
    %s598 = scalar_lea.sflag [#allocation3], 1
    %599 = vsyncpa %s598, 1

</llo_original>
